<compile_context>
chip_gen: v7x
topology: tpu7x:2x2x1
jax: 0.10.0
libtpu: 0.0.40
codegen_flags: <defaults>
</compile_context>

<pallas_src>
import jax
import jax.numpy as jnp
from jax.experimental import pallas as pl
from jax.experimental.pallas import tpu as pltpu

M = 32          # "channel" axis of the (1, 32, 1, 256) input -> matmul rows
K1 = 256        # linear1 in_features (combined-matmul contraction depth)
N1 = 128        # linear1 out_features (folded away offline)
N2 = 64         # linear2 out_features = kernel output width

_FLOPS = 2 * M * K1 * N2
_BYTES = (M * K1 * 4) + (K1 * N2 * 2) + (2 * N2 * 4) + (2 * M * 4) + (M * N2 * 4)


def _fused_linear_kernel(x_ref, w_ref, rowc_ref, n1_ref, n2_ref, o_ref):
    # Single combined matmul: cast x to bf16 in-kernel (hides under the MXU
    # push), accumulate in f32.
    x_mm = x_ref[...].astype(w_ref.dtype)                      # (32, 256) bf16
    acc = jnp.dot(x_mm, w_ref[...],
                  preferred_element_type=jnp.float32)          # (32, 64) f32

    c_row = rowc_ref[0:1, :]       # (1, 64) = b1 @ W2^T + b2
    colsum = rowc_ref[1:2, :]      # (1, 64) = colsum(W2^T)
    n1 = n1_ref[...]               # (32, 1) noise_a
    n2 = n2_ref[...]               # (32, 1) noise_b

    # v3 = (x@W1^T + b1 - n1) @ W2^T + b2 + n2, algebraically folded.
    out = acc + c_row + n2 - n1 * colsum                       # all f32
    o_ref[...] = out.astype(o_ref.dtype)


def fused_forward(x_2d, w_comb, row_consts, n1, n2):
    """All operands are tiny; one grid-less call, whole-array VMEM blocks."""
    vmem = lambda: pl.BlockSpec(memory_space=pltpu.MemorySpace.VMEM)
    return pl.pallas_call(
        _fused_linear_kernel,
        out_shape=jax.ShapeDtypeStruct((M, N2), jnp.float32),
        in_specs=[vmem() for _ in range(5)],
        out_specs=vmem(),
        cost_estimate=pl.CostEstimate(
            flops=_FLOPS, transcendentals=0, bytes_accessed=_BYTES),
    )(x_2d, w_comb, row_consts, n1, n2)


def model_forward(x, params, noise_a, noise_b):
    # All wrapper-side ops are metadata-only reshapes (no extra XLA kernels).
    x_2d = x.reshape(M, K1)                   # (32, 256) f32
    n1 = noise_a.reshape(M, 1)                # (32, 1)   f32
    n2 = noise_b.reshape(M, 1)                # (32, 1)   f32
    out = fused_forward(x_2d, params["w_comb"], params["row_consts"], n1, n2)
    return out.reshape(1, M, 1, N2)           # free (contiguous) reshape


def init_params(key):
    """Torch-layout f32 params, uniform +/- 1/sqrt(fan_in) like nn.Linear."""
    k1, k2, k3, k4 = jax.random.split(key, 4)
    bound1 = 1.0 / jnp.sqrt(float(K1))
    bound2 = 1.0 / jnp.sqrt(float(N1))
    return {
        "w1": jax.random.uniform(k1, (N1, K1), jnp.float32, -bound1, bound1),
        "b1": jax.random.uniform(k2, (N1,), jnp.float32, -bound1, bound1),
        "w2": jax.random.uniform(k3, (N2, N1), jnp.float32, -bound2, bound2),
        "b2": jax.random.uniform(k4, (N2,), jnp.float32, -bound2, bound2),
    }


def pack_params(raw, matmul_dtype=jnp.bfloat16):
    """One-time, weight-only precompute: collapse the affine chain offline."""
    w1_t = raw["w1"].T                                    # (256, 128) f32
    w2_t = raw["w2"].T                                    # (128, 64)  f32
    w_comb = (w1_t @ w2_t).astype(matmul_dtype)           # (256, 64)  bf16
    c_row = raw["b1"] @ w2_t + raw["b2"]                  # (64,)      f32
    colsum = w2_t.sum(axis=0)                             # (64,)      f32
    row_consts = jnp.stack([c_row, colsum], axis=0)       # (2, 64)    f32
    return {"w_comb": w_comb, "row_consts": row_consts}


if __name__ == "__main__":
    key = jax.random.PRNGKey(0)
    kx, kp, kn1, kn2 = jax.random.split(key, 4)

    x = jax.random.normal(kx, (1, M, 1, K1), jnp.float32)
    raw = init_params(kp)
    packed = pack_params(raw)                       # bf16 combined weight
    # forward-time torch.randn(1, 32, 1, 1) tensors, fixed deterministically
    noise_a = jax.random.normal(kn1, (1, M, 1, 1), jnp.float32)
    noise_b = jax.random.normal(kn2, (1, M, 1, 1), jnp.float32)

    fwd = jax.jit(model_forward)
    out = fwd(x, packed, noise_a, noise_b)
    jax.block_until_ready(out)

    # plain-JAX f32 reference of the torch semantics (two separate matmuls)
    x2 = x.reshape(M, K1)
    v1 = x2 @ raw["w1"].T + raw["b1"]
    v2 = v1 - noise_a.reshape(M, 1)
    v3 = v2 @ raw["w2"].T + raw["b2"] + noise_b.reshape(M, 1)
    ref = v3.reshape(1, M, 1, N2)

    assert out.shape == (1, M, 1, N2)
    # tolerance loosened because matmul operands are bf16 (f32 accumulation)
    max_err = float(jnp.max(jnp.abs(out - ref)))
    assert jnp.allclose(out, ref, atol=5e-2, rtol=5e-2), max_err

    print("KERNEL_OK")
</pallas_src>

<mosaic_0001>
module attributes {stable_mosaic.version = 11 : i64} {
  func.func @_fused_linear_kernel(%arg0: memref<32x256xf32, #tpu.memory_space<vmem>>, %arg1: memref<256x64xbf16, #tpu.memory_space<vmem>>, %arg2: memref<2x64xf32, #tpu.memory_space<vmem>>, %arg3: memref<32x1xf32, #tpu.memory_space<vmem>>, %arg4: memref<32x1xf32, #tpu.memory_space<vmem>>, %arg5: memref<32x64xf32, #tpu.memory_space<vmem>>) attributes {dimension_semantics = [], scalar_prefetch = 0 : i64, scratch_operands = 0 : i64, tpu.core_type = #tpu.core_type<tc>} {
    %c0 = arith.constant 0 : index
    %c0_0 = arith.constant 0 : index
    %0 = vector.load %arg0[%c0, %c0_0] : memref<32x256xf32, #tpu.memory_space<vmem>>, vector<32x256xf32>
    %1 = arith.truncf %0 : vector<32x256xf32> to vector<32x256xbf16>
    %c0_1 = arith.constant 0 : index
    %c0_2 = arith.constant 0 : index
    %2 = vector.load %arg1[%c0_1, %c0_2] : memref<256x64xbf16, #tpu.memory_space<vmem>>, vector<256x64xbf16>
    %cst = arith.constant dense<0.000000e+00> : vector<32x64xf32>
    %3 = tpu.matmul %1, %2, %cst {dimension_numbers = #tpu.dot_dimension_numbers<[1], [0], [0], [1], [0, 0, 1, 1], [], []>} : vector<32x256xbf16>, vector<256x64xbf16>, vector<32x64xf32> -> vector<32x64xf32>
    %c0_3 = arith.constant 0 : index
    %c0_4 = arith.constant 0 : index
    %4 = vector.load %arg2[%c0_3, %c0_4] : memref<2x64xf32, #tpu.memory_space<vmem>>, vector<1x64xf32>
    %c1 = arith.constant 1 : index
    %c0_5 = arith.constant 0 : index
    %5 = vector.load %arg2[%c1, %c0_5] : memref<2x64xf32, #tpu.memory_space<vmem>>, vector<1x64xf32>
    %c0_6 = arith.constant 0 : index
    %c0_7 = arith.constant 0 : index
    %6 = vector.load %arg3[%c0_6, %c0_7] : memref<32x1xf32, #tpu.memory_space<vmem>>, vector<32x1xf32>
    %c0_8 = arith.constant 0 : index
    %c0_9 = arith.constant 0 : index
    %7 = vector.load %arg4[%c0_8, %c0_9] : memref<32x1xf32, #tpu.memory_space<vmem>>, vector<32x1xf32>
    %8 = vector.broadcast %4 : vector<1x64xf32> to vector<32x64xf32>
    %9 = arith.addf %3, %8 : vector<32x64xf32>
    %10 = vector.broadcast %7 : vector<32x1xf32> to vector<32x64xf32>
    %11 = arith.addf %9, %10 : vector<32x64xf32>
    %12 = vector.broadcast %6 : vector<32x1xf32> to vector<32x64xf32>
    %13 = vector.broadcast %5 : vector<1x64xf32> to vector<32x64xf32>
    %14 = arith.mulf %12, %13 : vector<32x64xf32>
    %15 = arith.subf %11, %14 : vector<32x64xf32>
    %c0_10 = arith.constant 0 : index
    %c0_11 = arith.constant 0 : index
    %16 = vector.load %arg5[%c0_10, %c0_11] : memref<32x64xf32, #tpu.memory_space<vmem>>, vector<32x64xf32>
    tpu.vector_store %arg5[%c0_10, %c0_11], %15 {strides = array<i32>} : memref<32x64xf32, #tpu.memory_space<vmem>>, vector<32x64xf32>,
    return
  }
}

</mosaic_0001>

<llo_original>
// kernel: model_forward.1
$region0: #{model_forward.1}
  #allocation0 [shape = 'u32[]', space=smem, size = 0x4, offset = 0x4, fixed_abs, tag = 'smem constant byte address 0x4 - core index']
  #allocation1 [shape = 'u32[144,128]{1,0:T(1,128)}', space=vmem, size = 0x12000, scoped, tag = 'internal scratch']
  %s0 = inlined_call_operand.vmem [shape: f32[32,256], index: 0, kind: input, shape index: {}]
  %s1 = inlined_call_operand.vmem [shape: bf16[256,64], index: 1, kind: input, shape index: {}]
  %s2 = inlined_call_operand.vmem [shape: f32[2,64], index: 2, kind: input, shape index: {}]
  %s3 = inlined_call_operand.vmem [shape: f32[32,1], index: 3, kind: input, shape index: {}]
  %s4 = inlined_call_operand.vmem [shape: f32[32,1], index: 4, kind: input, shape index: {}]
  %s5 = inlined_call_operand.hbm [shape: f32[32,64], index: 5, kind: output, shape index: {}]
  %s6 = sld [smem:[#allocation0]]
  $region30: #{model_forward.1} parent=0
    _
  %s8 = ssub.s32 1, %s6
  %s9 = scalar_select 0, %s8, %s6
  $region1: #{model_forward.1} parent=0
    #allocation2 [shape = 'u8[16384]{0}', space=vmem, size = 0x4000, scoped, tag = 'output window, operand 0, single buffered']
    #allocation3 [shape = 's32[1]{0}', space=sflag, size = 0x4, scoped, tag = 'scoped memory for model_forward.1']
    %10 = vsyncpa [#allocation3], 0
    // Predicated region
    $region2: #{model_forward.1} parent=1 // pred_check
      _
    $region3: #{model_forward.1} parent=1 // pred_check_branch
      %12 = sbr.rel (0) target = $region5
    $region4: #{model_forward.1} parent=1 // pred_region
      _
    $region5: #{model_forward.1} parent=1 // pred_fallthru
      _
    // Predicated region
    $region6: #{model_forward.1} parent=1 // pred_check
      _
    $region7: #{model_forward.1} parent=1 // pred_check_branch
      %14 = sbr.rel (0) target = $region9
    $region8: #{model_forward.1} parent=1 // pred_region
      _
    $region9: #{model_forward.1} parent=1 // pred_fallthru
      _
    // Predicated region
    $region10: #{model_forward.1} parent=1 // pred_check
      _
    $region11: #{model_forward.1} parent=1 // pred_check_branch
      %16 = sbr.rel (0) target = $region13
    $region12: #{model_forward.1} parent=1 // pred_region
      _
    $region13: #{model_forward.1} parent=1 // pred_fallthru
      _
    // Predicated region
    $region14: #{model_forward.1} parent=1 // pred_check
      _
    $region15: #{model_forward.1} parent=1 // pred_check_branch
      %18 = sbr.rel (0) target = $region17
    $region16: #{model_forward.1} parent=1 // pred_region
      _
    $region17: #{model_forward.1} parent=1 // pred_fallthru
      _
    // Predicated region
    $region18: #{model_forward.1} parent=1 // pred_check
      _
    $region19: #{model_forward.1} parent=1 // pred_check_branch
      %20 = sbr.rel (0) target = $region21
    $region20: #{model_forward.1} parent=1 // pred_region
      _
    $region21: #{model_forward.1} parent=1 // pred_fallthru
      _
    %v22 = vld [vmem:[%s0] sm:$0xff]
    %v23 = vld [vmem:[%s0 + $0x8] sm:$0xff]
    %v24 = vld [vmem:[%s0 + $0x10] sm:$0xff]
    %v25 = vld [vmem:[%s0 + $0x18] sm:$0xff]
    %v26 = vld [vmem:[%s0 + $0x20] sm:$0xff]
    %v27 = vld [vmem:[%s0 + $0x28] sm:$0xff]
    %v28 = vld [vmem:[%s0 + $0x30] sm:$0xff]
    %v29 = vld [vmem:[%s0 + $0x38] sm:$0xff]
    %v30 = vpack.c.bf16 %v24, %v22
    %v31 = vpack.c.bf16 %v25, %v23
    %v32 = vpack.c.bf16 %v28, %v26
    %v33 = vpack.c.bf16 %v29, %v27
    %v34 = vld [vmem:[%s1] sm:$0xf]
    %v35 = vld [vmem:[%s1 + $0x4] sm:$0xf]
    %v36 = vld [vmem:[%s1 + $0x8] sm:$0xf]
    %v37 = vld [vmem:[%s1 + $0xc] sm:$0xf]
    %v38 = vld [vmem:[%s1 + $0x10] sm:$0xf]
    %v39 = vld [vmem:[%s1 + $0x14] sm:$0xf]
    %v40 = vld [vmem:[%s1 + $0x18] sm:$0xf]
    %v41 = vld [vmem:[%s1 + $0x1c] sm:$0xf]
    %v42 = vld [vmem:[%s1 + $0x20] sm:$0xf]
    %v43 = vld [vmem:[%s1 + $0x24] sm:$0xf]
    %v44 = vld [vmem:[%s1 + $0x28] sm:$0xf]
    %v45 = vld [vmem:[%s1 + $0x2c] sm:$0xf]
    %v46 = vld [vmem:[%s1 + $0x30] sm:$0xf]
    %v47 = vld [vmem:[%s1 + $0x34] sm:$0xf]
    %v48 = vld [vmem:[%s1 + $0x38] sm:$0xf]
    %v49 = vld [vmem:[%s1 + $0x3c] sm:$0xf]
    %v50 = vld [vmem:[%s1 + $0x40] sm:$0xf]
    %v51 = vld [vmem:[%s1 + $0x44] sm:$0xf]
    %v52 = vld [vmem:[%s1 + $0x48] sm:$0xf]
    %v53 = vld [vmem:[%s1 + $0x4c] sm:$0xf]
    %v54 = vld [vmem:[%s1 + $0x50] sm:$0xf]
    %v55 = vld [vmem:[%s1 + $0x54] sm:$0xf]
    %v56 = vld [vmem:[%s1 + $0x58] sm:$0xf]
    %v57 = vld [vmem:[%s1 + $0x5c] sm:$0xf]
    %v58 = vld [vmem:[%s1 + $0x60] sm:$0xf]
    %v59 = vld [vmem:[%s1 + $0x64] sm:$0xf]
    %v60 = vld [vmem:[%s1 + $0x68] sm:$0xf]
    %v61 = vld [vmem:[%s1 + $0x6c] sm:$0xf]
    %v62 = vld [vmem:[%s1 + $0x70] sm:$0xf]
    %v63 = vld [vmem:[%s1 + $0x74] sm:$0xf]
    %v64 = vld [vmem:[%s1 + $0x78] sm:$0xf]
    %v65 = vld [vmem:[%s1 + $0x7c] sm:$0xf]
    %v66 = vld [vmem:[%s2] sm:$0x1]
    %v67 = vld [vmem:[%s2 + $0x1] sm:$0x1]
    %v68 = vld [vmem:[%s3] sm:$0xff]
    %v69 = vld [vmem:[%s3 + $0x8] sm:$0xff]
    %v70 = vld [vmem:[%s3 + $0x10] sm:$0xff]
    %v71 = vld [vmem:[%s3 + $0x18] sm:$0xff]
    %v72 = vld [vmem:[%s4] sm:$0xff]
    %v73 = vld [vmem:[%s4 + $0x8] sm:$0xff]
    %v74 = vld [vmem:[%s4 + $0x10] sm:$0xff]
    %v75 = vld [vmem:[%s4 + $0x18] sm:$0xff]
    %v76 = vlaneseq
    %v77 = vshrl.u32 %v76, 7
    %v78 = vsub.s32 0, %v77
    %v79 = vrot.slane %v66, %v78
    %v112 = vunpack.c.l.b16 %v34
    %v113 = vunpack.c.l.b16 %v35
    %v114 = vunpack.c.l.b16 %v36
    %v115 = vunpack.c.l.b16 %v37
    %v116 = vunpack.c.l.b16 %v38
    %v117 = vunpack.c.l.b16 %v39
    %v118 = vunpack.c.l.b16 %v40
    %v119 = vunpack.c.l.b16 %v41
    %v120 = vunpack.c.l.b16 %v42
    %v121 = vunpack.c.l.b16 %v43
    %v122 = vunpack.c.l.b16 %v44
    %v123 = vunpack.c.l.b16 %v45
    %v124 = vunpack.c.l.b16 %v46
    %v125 = vunpack.c.l.b16 %v47
    %v126 = vunpack.c.l.b16 %v48
    %v127 = vunpack.c.l.b16 %v49
    %v128 = vunpack.c.l.b16 %v50
    %v129 = vunpack.c.l.b16 %v51
    %v130 = vunpack.c.l.b16 %v52
    %v131 = vunpack.c.l.b16 %v53
    %v132 = vunpack.c.l.b16 %v54
    %v133 = vunpack.c.l.b16 %v55
    %v134 = vunpack.c.l.b16 %v56
    %v135 = vunpack.c.l.b16 %v57
    %v136 = vunpack.c.l.b16 %v58
    %v137 = vunpack.c.l.b16 %v59
    %v138 = vunpack.c.l.b16 %v60
    %v139 = vunpack.c.l.b16 %v61
    %v140 = vunpack.c.l.b16 %v62
    %v141 = vunpack.c.l.b16 %v63
    %v142 = vunpack.c.l.b16 %v64
    %v143 = vunpack.c.l.b16 %v65
    %v144 = vpack.c.b16 %v113, %v112
    %v145 = vpack.c.b16 %v115, %v114
    %v146 = vpack.c.b16 %v117, %v116
    %v147 = vpack.c.b16 %v119, %v118
    %v148 = vpack.c.b16 %v121, %v120
    %v149 = vpack.c.b16 %v123, %v122
    %v150 = vpack.c.b16 %v125, %v124
    %v151 = vpack.c.b16 %v127, %v126
    %v152 = vpack.c.b16 %v129, %v128
    %v153 = vpack.c.b16 %v131, %v130
    %v154 = vpack.c.b16 %v133, %v132
    %v155 = vpack.c.b16 %v135, %v134
    %v156 = vpack.c.b16 %v137, %v136
    %v157 = vpack.c.b16 %v139, %v138
    %v158 = vpack.c.b16 %v141, %v140
    %v159 = vpack.c.b16 %v143, %v142
    %176 = vmatprep.subr.bf16.mxu0 0
    %177 = vmatpush1.bf16.msra.mxu0 %v144
    %178 = vmatprep.subr.bf16.mxu0 0
    %179 = vmatpush1.bf16.msra.mxu0 %v145
    %180 = vmatprep.subr.bf16.mxu0 0
    %181 = vmatpush1.bf16.msra.mxu0 %v146
    %182 = vmatprep.subr.bf16.mxu0 0
    %183 = vmatpush1.bf16.msra.mxu0 %v147
    %184 = vmatprep.subr.bf16.mxu0 0
    %185 = vmatpush1.bf16.msra.mxu0 %v148
    %186 = vmatprep.subr.bf16.mxu0 0
    %187 = vmatpush1.bf16.msra.mxu0 %v149
    %188 = vmatprep.subr.bf16.mxu0 0
    %189 = vmatpush1.bf16.msra.mxu0 %v150
    %190 = vmatprep.subr.bf16.mxu0 0
    %191 = vmatpush1.bf16.msra.mxu0 %v151
    %192 = vmatprep.subr.bf16.mxu0 0
    %193 = vmatpush1.bf16.msra.mxu0 %v152
    %194 = vmatprep.subr.bf16.mxu0 0
    %195 = vmatpush1.bf16.msra.mxu0 %v153
    %196 = vmatprep.subr.bf16.mxu0 0
    %197 = vmatpush1.bf16.msra.mxu0 %v154
    %198 = vmatprep.subr.bf16.mxu0 0
    %199 = vmatpush1.bf16.msra.mxu0 %v155
    %200 = vmatprep.subr.bf16.mxu0 0
    %201 = vmatpush1.bf16.msra.mxu0 %v156
    %202 = vmatprep.subr.bf16.mxu0 0
    %203 = vmatpush1.bf16.msra.mxu0 %v157
    %204 = vmatprep.subr.bf16.mxu0 0
    %205 = vmatpush1.bf16.msra.mxu0 %v158
    %206 = vmatprep.subr.bf16.mxu0 0
    %207 = vmatpush1.bf16.msra.mxu0 %v159
    %208 = vmatprep.mubr.bf16.mxu0 %v31
    %209 = vmatmul.mubr.bf16.gmra.mrb[0].mxu0 %v30
    %v210 = vpop.f32.mrb[0].mxu0
    %v211 = vadd.f32 %v79, %v210
    %v212 = vpop.f32.mrb[0].mxu0
    %v213 = vpop.f32.mrb[0].mxu0
    %v214 = vadd.f32 %v79, %v213
    %v215 = vpop.f32.mrb[0].mxu0
    %216 = vmatprep.mubr.bf16.mxu0 %v33
    %217 = vmatmul.mubr.bf16.gmra.mrb[0].mxu0 %v32
    %v218 = vpop.f32.mrb[0].mxu0
    %v219 = vadd.f32 %v79, %v218
    %v220 = vpop.f32.mrb[0].mxu0
    %v221 = vpop.f32.mrb[0].mxu0
    %v222 = vadd.f32 %v79, %v221
    %v223 = vpop.f32.mrb[0].mxu0
    %224 = vdwg.mxu0
    %226 = vset.pattern.permute.xlu0 0
    %227 = vperm.xlu0 %226, %v72
    %v228 = vpop.permute.xlu0 %227
    %231 = vset.pattern.permute.xlu0 0
    %232 = vperm.xlu0 %231, %v73
    %v233 = vpop.permute.xlu0 %232
    %236 = vset.pattern.permute.xlu0 0
    %237 = vperm.xlu0 %236, %v74
    %v238 = vpop.permute.xlu0 %237
    %241 = vset.pattern.permute.xlu0 0
    %242 = vperm.xlu0 %241, %v75
    %v243 = vpop.permute.xlu0 %242
    %v245 = vadd.f32 %v211, %v228
    %v246 = vadd.f32 %v214, %v233
    %v247 = vadd.f32 %v219, %v238
    %v248 = vadd.f32 %v222, %v243
    %250 = vset.pattern.permute.xlu0 0
    %251 = vperm.xlu0 %250, %v68
    %v252 = vpop.permute.xlu0 %251
    %255 = vset.pattern.permute.xlu0 0
    %256 = vperm.xlu0 %255, %v69
    %v257 = vpop.permute.xlu0 %256
    %260 = vset.pattern.permute.xlu0 0
    %261 = vperm.xlu0 %260, %v70
    %v262 = vpop.permute.xlu0 %261
    %265 = vset.pattern.permute.xlu0 0
    %266 = vperm.xlu0 %265, %v71
    %v267 = vpop.permute.xlu0 %266
    %v269 = vlaneseq
    %v270 = vshrl.u32 %v269, 7
    %v271 = vsub.s32 0, %v270
    %v272 = vrot.slane %v67, %v271
    %v273 = vmul.f32 %v252, %v272
    %v274 = vmul.f32 %v257, %v272
    %v275 = vmul.f32 %v262, %v272
    %v276 = vmul.f32 %v267, %v272
    %v277 = vsub.f32 %v245, %v273
    %v278 = vsub.f32 %v246, %v274
    %v279 = vsub.f32 %v247, %v275
    %v280 = vsub.f32 %v248, %v276
    %vm281 = vcmask 523264
    %282 = vst.msk [vmem:[#allocation2] sm:$0xff] %vm281, %v277
    %283 = vst.msk [vmem:[#allocation2 + $0x8] sm:$0xff] %vm281, %v278
    %284 = vst.msk [vmem:[#allocation2 + $0x10] sm:$0xff] %vm281, %v279
    %285 = vst.msk [vmem:[#allocation2 + $0x18] sm:$0xff] %vm281, %v280
    // Predicated region
    $region22: #{model_forward.1} parent=1 // pred_check
      _
    $region23: #{model_forward.1} parent=1 // pred_check_branch
      %287 = sbr.rel (0) target = $region25
    $region24: #{model_forward.1} parent=1 // pred_region
      %s289 = ssub.s32 512, 512
      %290 = vsyncadd [#allocation3], %s289
      %s291 = sshll.u32 [#allocation2], 4
      %s292 = int_to_ptr.vmem [resolvable:$true] %s291
      %297 = dma.vmem_to_hbm [thread:$0]  %s292, 512, %s5, [#allocation3], 128, 128, 8
    $region25: #{model_forward.1} parent=1 // pred_fallthru
      _
    // Predicated region
    $region26: #{model_forward.1} parent=1 // pred_check
      _
    $region27: #{model_forward.1} parent=1 // pred_check_branch
      %299 = sbr.rel (0) target = $region29
    $region28: #{model_forward.1} parent=1 // pred_region
      %300 = dma.done [#allocation3], 512
    $region29: #{model_forward.1} parent=1 // pred_fallthru
      _
    %301 = vsyncpa [#allocation3], 1

</llo_original>
